<compile_context>
chip_gen: v7x
topology: tpu7x:2x2x1
jax: 0.10.0
libtpu: 0.0.40
codegen_flags: <defaults>
</compile_context>

<pallas_src>
import functools

import jax
import jax.numpy as jnp
from jax.experimental import pallas as pl
from jax.experimental.pallas import tpu as pltpu

LANE = 128                 # f32/bf16 lane width
DEFAULT_BATCH_TILE = 128   # M rows per grid step; 256 is a good pick on v6e/v7x


def _round_up(n, m):
    return (n + m - 1) // m * m


# ----------------------------------------------------------------------------
# Kernel: fused 4-layer MLP  tanh -> tanh -> tanh -> sigmoid
# ----------------------------------------------------------------------------
def _ae_kernel(x_ref, w_ref, b_ref, o_ref):
    """x_ref: (M, D) f32, w_ref: (4, D, D) bf16, b_ref: (4, 1, D) f32, o_ref: (M, D) f32."""
    z = x_ref[...]
    for i, act in enumerate((jnp.tanh, jnp.tanh, jnp.tanh, jax.nn.sigmoid)):
        pre = jnp.dot(z.astype(jnp.bfloat16), w_ref[i],
                      preferred_element_type=jnp.float32) + b_ref[i]
        z = act(pre)
    o_ref[...] = z.astype(o_ref.dtype)


# ----------------------------------------------------------------------------
# Parameters (mimics nn.Linear default init) and TPU packing
# ----------------------------------------------------------------------------
def init_autoencoder_params(key, original_size, hidden_size):
    """f32 params; weights stored transposed vs. PyTorch, i.e. shape (in, out)."""
    mid_size = (original_size + hidden_size) // 2
    dims = [(original_size, mid_size),
            (mid_size, hidden_size),
            (hidden_size, mid_size),
            (mid_size, original_size)]
    params = []
    keys = jax.random.split(key, 2 * len(dims))
    for i, (fan_in, fan_out) in enumerate(dims):
        bound = 1.0 / (fan_in ** 0.5)
        w = jax.random.uniform(keys[2 * i], (fan_in, fan_out),
                               jnp.float32, -bound, bound)
        b = jax.random.uniform(keys[2 * i + 1], (1, fan_out),
                               jnp.float32, -bound, bound)
        params.append((w, b))
    return params


def pack_params_for_tpu(params):
    """Zero-pad every layer to a common (D, D) / (1, D) and stack.

    Returns (w_stack bf16 (4, D, D), b_stack f32 (4, 1, D)).  Done once,
    outside the forward.  Zero padding is mathematically exact on the real
    columns; bf16 weight storage introduces ~1e-2 relative deviation.
    """
    dsz = max(_round_up(max(w.shape), LANE) for w, _ in params)
    w_stack = jnp.stack([
        jnp.pad(w, ((0, dsz - w.shape[0]), (0, dsz - w.shape[1])))
        for w, _ in params
    ]).astype(jnp.bfloat16)
    b_stack = jnp.stack([
        jnp.pad(b, ((0, 0), (0, dsz - b.shape[1])))
        for _, b in params
    ]).astype(jnp.float32)
    return w_stack, b_stack


# ----------------------------------------------------------------------------
# Forwards
# ----------------------------------------------------------------------------
@jax.jit
def autoencoder_forward(x, packed_params):
    """Exact module semantics: z = x.reshape(1, -1); encode; decode; reshape."""
    w_stack, b_stack = packed_params
    dsz = w_stack.shape[-1]
    original_size = x.size

    xf = x.reshape(1, original_size).astype(jnp.float32)
    if original_size != dsz:                       # lane-pad only when needed
        xf = jnp.pad(xf, ((0, 0), (0, dsz - original_size)))

    vmem = pl.BlockSpec(memory_space=pltpu.MemorySpace.VMEM)
    out = pl.pallas_call(
        _ae_kernel,
        out_shape=jax.ShapeDtypeStruct((1, dsz), jnp.float32),
        in_specs=[vmem, vmem, vmem],
        out_specs=vmem,
    )(xf, w_stack, b_stack)

    return out[0, :original_size].reshape(x.shape).astype(x.dtype)


@functools.partial(jax.jit, static_argnames=("batch_tile",))
def autoencoder_forward_batch(xs, packed_params, *, batch_tile=DEFAULT_BATCH_TILE):
    """Applies the module's forward independently to every xs[i] in ONE call.

    Fills the MXU M dimension with real rows; parallel grid over batch tiles
    (uses v7x's second TensorCore); weights/biases stay VMEM-resident.
    """
    w_stack, b_stack = packed_params
    dsz = w_stack.shape[-1]
    batch = xs.shape[0]
    original_size = xs[0].size

    xf = xs.reshape(batch, original_size).astype(jnp.float32)
    bpad = _round_up(batch, batch_tile)
    xf = jnp.pad(xf, ((0, bpad - batch), (0, dsz - original_size)))

    out = pl.pallas_call(
        _ae_kernel,
        out_shape=jax.ShapeDtypeStruct((bpad, dsz), jnp.float32),
        grid=(bpad // batch_tile,),
        in_specs=[
            pl.BlockSpec((batch_tile, dsz), lambda i: (i, 0)),
            pl.BlockSpec((4, dsz, dsz), lambda i: (0, 0, 0)),   # resident
            pl.BlockSpec((4, 1, dsz), lambda i: (0, 0, 0)),     # resident
        ],
        out_specs=pl.BlockSpec((batch_tile, dsz), lambda i: (i, 0)),
        compiler_params=pltpu.CompilerParams(
            dimension_semantics=("parallel",)),
    )(xf, w_stack, b_stack)

    return out[:batch, :original_size].reshape(xs.shape).astype(xs.dtype)


# ----------------------------------------------------------------------------
# Pure-JAX reference (f32, unpadded) — mirrors the PyTorch forward exactly
# ----------------------------------------------------------------------------
def _reference_forward(x, params):
    z = x.reshape(1, -1).astype(jnp.float32)
    (w1, b1), (w2, b2), (w3, b3), (w4, b4) = params
    z = jnp.tanh(z @ w1 + b1)
    z = jnp.tanh(z @ w2 + b2)
    z = jnp.tanh(z @ w3 + b3)
    z = jax.nn.sigmoid(z @ w4 + b4)
    return z.reshape(x.shape).astype(x.dtype)


if __name__ == "__main__":
    key = jax.random.PRNGKey(0)
    k_x, k_b, k_p = jax.random.split(key, 3)

    # Per-sample x of shape (16, 16) -> original_size = 256, hidden_size = 64,
    # mid_size = 160 (padded internally to a common D = 256 square).
    original_size = 16 * 16
    hidden_size = 64

    params = init_autoencoder_params(k_p, original_size, hidden_size)
    packed = pack_params_for_tpu(params)

    # 1) Single-sample forward (the module's exact semantics).
    x = jax.random.normal(k_x, (16, 16), jnp.float32)
    y = jax.block_until_ready(autoencoder_forward(x, packed))
    y_ref = _reference_forward(x, params)
    assert y.shape == x.shape and y.dtype == x.dtype
    # bf16 weights -> ~1e-2-level deviation from the f32 reference.
    assert jnp.allclose(y, y_ref, atol=2e-2, rtol=2e-2), "single-sample mismatch"

    # 2) Batched forward: 256 samples in one fused pallas_call (grid of 2
    #    batch tiles of 128 rows each), equivalent to vmapping the module.
    xs = jax.random.normal(k_b, (256, 16, 16), jnp.float32)
    ys = jax.block_until_ready(autoencoder_forward_batch(xs, packed))
    ys_ref = jax.vmap(lambda s: _reference_forward(s, params))(xs)
    assert ys.shape == xs.shape and ys.dtype == xs.dtype
    assert jnp.allclose(ys, ys_ref, atol=2e-2, rtol=2e-2), "batched mismatch"

    print("KERNEL_OK")
</pallas_src>

<mosaic_0001>
module attributes {stable_mosaic.version = 11 : i64} {
  func.func @_ae_kernel(%arg0: memref<1x256xf32, #tpu.memory_space<vmem>>, %arg1: memref<4x256x256xbf16, #tpu.memory_space<vmem>>, %arg2: memref<4x1x256xf32, #tpu.memory_space<vmem>>, %arg3: memref<1x256xf32, #tpu.memory_space<vmem>>) attributes {dimension_semantics = [], scalar_prefetch = 0 : i64, scratch_operands = 0 : i64, tpu.core_type = #tpu.core_type<tc>} {
    %c0 = arith.constant 0 : index
    %c0_0 = arith.constant 0 : index
    %0 = vector.load %arg0[%c0, %c0_0] : memref<1x256xf32, #tpu.memory_space<vmem>>, vector<1x256xf32>
    %1 = arith.truncf %0 : vector<1x256xf32> to vector<1x256xbf16>
    %c0_1 = arith.constant 0 : index
    %c0_2 = arith.constant 0 : index
    %c0_3 = arith.constant 0 : index
    %2 = vector.load %arg1[%c0_1, %c0_2, %c0_3] : memref<4x256x256xbf16, #tpu.memory_space<vmem>>, vector<1x256x256xbf16>
    %3 = vector.shape_cast %2 : vector<1x256x256xbf16> to vector<256x256xbf16>
    %cst = arith.constant dense<0.000000e+00> : vector<1x256xf32>
    %4 = tpu.matmul %1, %3, %cst {dimension_numbers = #tpu.dot_dimension_numbers<[1], [0], [0], [1], [0, 0, 1, 1], [], []>} : vector<1x256xbf16>, vector<256x256xbf16>, vector<1x256xf32> -> vector<1x256xf32>
    %c0_4 = arith.constant 0 : index
    %c0_5 = arith.constant 0 : index
    %c0_6 = arith.constant 0 : index
    %5 = vector.load %arg2[%c0_4, %c0_5, %c0_6] : memref<4x1x256xf32, #tpu.memory_space<vmem>>, vector<1x1x256xf32>
    %6 = vector.shape_cast %5 : vector<1x1x256xf32> to vector<1x256xf32>
    %7 = arith.addf %4, %6 : vector<1x256xf32>
    %8 = math.tanh %7 : vector<1x256xf32>
    %9 = arith.truncf %8 : vector<1x256xf32> to vector<1x256xbf16>
    %c1 = arith.constant 1 : index
    %c0_7 = arith.constant 0 : index
    %c0_8 = arith.constant 0 : index
    %10 = vector.load %arg1[%c1, %c0_7, %c0_8] : memref<4x256x256xbf16, #tpu.memory_space<vmem>>, vector<1x256x256xbf16>
    %11 = vector.shape_cast %10 : vector<1x256x256xbf16> to vector<256x256xbf16>
    %cst_9 = arith.constant dense<0.000000e+00> : vector<1x256xf32>
    %12 = tpu.matmul %9, %11, %cst_9 {dimension_numbers = #tpu.dot_dimension_numbers<[1], [0], [0], [1], [0, 0, 1, 1], [], []>} : vector<1x256xbf16>, vector<256x256xbf16>, vector<1x256xf32> -> vector<1x256xf32>
    %c1_10 = arith.constant 1 : index
    %c0_11 = arith.constant 0 : index
    %c0_12 = arith.constant 0 : index
    %13 = vector.load %arg2[%c1_10, %c0_11, %c0_12] : memref<4x1x256xf32, #tpu.memory_space<vmem>>, vector<1x1x256xf32>
    %14 = vector.shape_cast %13 : vector<1x1x256xf32> to vector<1x256xf32>
    %15 = arith.addf %12, %14 : vector<1x256xf32>
    %16 = math.tanh %15 : vector<1x256xf32>
    %17 = arith.truncf %16 : vector<1x256xf32> to vector<1x256xbf16>
    %c2 = arith.constant 2 : index
    %c0_13 = arith.constant 0 : index
    %c0_14 = arith.constant 0 : index
    %18 = vector.load %arg1[%c2, %c0_13, %c0_14] : memref<4x256x256xbf16, #tpu.memory_space<vmem>>, vector<1x256x256xbf16>
    %19 = vector.shape_cast %18 : vector<1x256x256xbf16> to vector<256x256xbf16>
    %cst_15 = arith.constant dense<0.000000e+00> : vector<1x256xf32>
    %20 = tpu.matmul %17, %19, %cst_15 {dimension_numbers = #tpu.dot_dimension_numbers<[1], [0], [0], [1], [0, 0, 1, 1], [], []>} : vector<1x256xbf16>, vector<256x256xbf16>, vector<1x256xf32> -> vector<1x256xf32>
    %c2_16 = arith.constant 2 : index
    %c0_17 = arith.constant 0 : index
    %c0_18 = arith.constant 0 : index
    %21 = vector.load %arg2[%c2_16, %c0_17, %c0_18] : memref<4x1x256xf32, #tpu.memory_space<vmem>>, vector<1x1x256xf32>
    %22 = vector.shape_cast %21 : vector<1x1x256xf32> to vector<1x256xf32>
    %23 = arith.addf %20, %22 : vector<1x256xf32>
    %24 = math.tanh %23 : vector<1x256xf32>
    %25 = arith.truncf %24 : vector<1x256xf32> to vector<1x256xbf16>
    %c3 = arith.constant 3 : index
    %c0_19 = arith.constant 0 : index
    %c0_20 = arith.constant 0 : index
    %26 = vector.load %arg1[%c3, %c0_19, %c0_20] : memref<4x256x256xbf16, #tpu.memory_space<vmem>>, vector<1x256x256xbf16>
    %27 = vector.shape_cast %26 : vector<1x256x256xbf16> to vector<256x256xbf16>
    %cst_21 = arith.constant dense<0.000000e+00> : vector<1x256xf32>
    %28 = tpu.matmul %25, %27, %cst_21 {dimension_numbers = #tpu.dot_dimension_numbers<[1], [0], [0], [1], [0, 0, 1, 1], [], []>} : vector<1x256xbf16>, vector<256x256xbf16>, vector<1x256xf32> -> vector<1x256xf32>
    %c3_22 = arith.constant 3 : index
    %c0_23 = arith.constant 0 : index
    %c0_24 = arith.constant 0 : index
    %29 = vector.load %arg2[%c3_22, %c0_23, %c0_24] : memref<4x1x256xf32, #tpu.memory_space<vmem>>, vector<1x1x256xf32>
    %30 = vector.shape_cast %29 : vector<1x1x256xf32> to vector<1x256xf32>
    %31 = arith.addf %28, %30 : vector<1x256xf32>
    %32 = arith.negf %31 : vector<1x256xf32>
    %33 = math.exp %32 : vector<1x256xf32>
    %cst_25 = arith.constant 1.000000e+00 : f32
    %34 = vector.broadcast %cst_25 : f32 to vector<1x256xf32>
    %35 = arith.addf %34, %33 : vector<1x256xf32>
    %36 = arith.divf %34, %35 : vector<1x256xf32>
    %c0_26 = arith.constant 0 : index
    %c0_27 = arith.constant 0 : index
    %37 = vector.load %arg3[%c0_26, %c0_27] : memref<1x256xf32, #tpu.memory_space<vmem>>, vector<1x256xf32>
    tpu.vector_store %arg3[%c0_26, %c0_27], %36 {strides = array<i32>} : memref<1x256xf32, #tpu.memory_space<vmem>>, vector<1x256xf32>,
    return
  }
}

</mosaic_0001>

<llo_original>
// kernel: squeeze.1
$region0: #{squeeze.1}
  %s0 = inlined_call_operand.vmem [shape: f32[256], index: 0, kind: input, shape index: {}]
  %s1 = inlined_call_operand.hbm [shape: f32[16,16], index: 1, kind: output, shape index: {}]
  $region1: #{squeeze.1} parent=0
    #allocation0 [shape = 'u8[8192]{0}', space=vmem, size = 0x2000, scoped, tag = 'operand span for operand 1']
    #allocation1 [shape = 's32[1]{0}', space=sflag, size = 0x4, scoped, tag = 'scoped memory for squeeze.1']
    #allocation2 [shape = 'u8[4096]{0}', space=vmem, size = 0x1000, scoped, tag = 'scoped mem for input reshape']
    %2 = vsyncpa [#allocation1], 0
    %s4 = sshllo.u32 0, 2
    %v5 = vld [vmem:[%s0] sm:%s4]
    %6 = vst [vmem:[#allocation2] sm:%s4] %v5
    %v7 = vld [vmem:[#allocation2] sm:$0x3]
    %vm8 = vcmask 130048
    %9 = vst.msk [vmem:[#allocation0] ss:$8 sm:$0x3] %vm8, %v7
    %v10 = vld [vmem:[#allocation2] sm:$0x3]
    %11 = vrot.lane.b32.xlu0 %v10, 112
    %v12 = vpop.permute.xlu0 %11
    %vm13 = vcmask 130048
    %s14 = scalar_lea.vmem [#allocation0], 1
    %15 = vst.msk [vmem:[%s14] ss:$8 sm:$0x3] %vm13, %v12
    %v16 = vld [vmem:[#allocation2] sm:$0x3]
    %17 = vrot.lane.b32.xlu0 %v16, 96
    %v18 = vpop.permute.xlu0 %17
    %vm19 = vcmask 130048
    %s20 = scalar_lea.vmem [#allocation0], 2
    %21 = vst.msk [vmem:[%s20] ss:$8 sm:$0x3] %vm19, %v18
    %v22 = vld [vmem:[#allocation2] sm:$0x3]
    %23 = vrot.lane.b32.xlu0 %v22, 80
    %v24 = vpop.permute.xlu0 %23
    %vm25 = vcmask 130048
    %s26 = scalar_lea.vmem [#allocation0], 3
    %27 = vst.msk [vmem:[%s26] ss:$8 sm:$0x3] %vm25, %v24
    %v28 = vld [vmem:[#allocation2] sm:$0x3]
    %29 = vrot.lane.b32.xlu0 %v28, 64
    %v30 = vpop.permute.xlu0 %29
    %vm31 = vcmask 130048
    %s32 = scalar_lea.vmem [#allocation0], 4
    %33 = vst.msk [vmem:[%s32] ss:$8 sm:$0x3] %vm31, %v30
    %v34 = vld [vmem:[#allocation2] sm:$0x3]
    %35 = vrot.lane.b32.xlu0 %v34, 48
    %v36 = vpop.permute.xlu0 %35
    %vm37 = vcmask 130048
    %s38 = scalar_lea.vmem [#allocation0], 5
    %39 = vst.msk [vmem:[%s38] ss:$8 sm:$0x3] %vm37, %v36
    %v40 = vld [vmem:[#allocation2] sm:$0x3]
    %41 = vrot.lane.b32.xlu0 %v40, 32
    %v42 = vpop.permute.xlu0 %41
    %vm43 = vcmask 130048
    %s44 = scalar_lea.vmem [#allocation0], 6
    %45 = vst.msk [vmem:[%s44] ss:$8 sm:$0x3] %vm43, %v42
    %v46 = vld [vmem:[#allocation2] sm:$0x3]
    %47 = vrot.lane.b32.xlu0 %v46, 16
    %v48 = vpop.permute.xlu0 %47
    %vm49 = vcmask 130048
    %s50 = scalar_lea.vmem [#allocation0], 7
    %51 = vst.msk [vmem:[%s50] ss:$8 sm:$0x3] %vm49, %v48
    %s53 = ssub.s32 256, 256
    %54 = vsyncadd [#allocation1], %s53
    %s56 = sshll.u32 [#allocation0], 4
    %s57 = int_to_ptr.vmem [resolvable:$true] %s56
    %59 = dma.vmem_to_hbm [thread:$0]  %s57, 256, %s1, [#allocation1]
    %60 = dma.done [#allocation1], 256
    %61 = vsyncpa [#allocation1], 1

// kernel: autoencoder_forward.1
$region0: #{autoencoder_forward.1}
  #allocation0 [shape = 'u32[]', space=smem, size = 0x4, offset = 0x4, fixed_abs, tag = 'smem constant byte address 0x4 - core index']
  #allocation1 [shape = 'u32[144,128]{1,0:T(1,128)}', space=vmem, size = 0x12000, scoped, tag = 'internal scratch']
  %s0 = inlined_call_operand.vmem [shape: f32[1,256], index: 0, kind: input, shape index: {}]
  %s1 = inlined_call_operand.hbm [shape: bf16[4,256,256], index: 1, kind: input, shape index: {}]
  %s2 = inlined_call_operand.vmem [shape: f32[4,1,256], index: 2, kind: input, shape index: {}]
  %s3 = inlined_call_operand.vmem [shape: f32[1,256], index: 3, kind: output, shape index: {}]
  %s4 = sld [smem:[#allocation0]]
  $region26: #{autoencoder_forward.1} parent=0
    _
  %s6 = ssub.s32 1, %s4
  %s7 = scalar_select 0, %s6, %s4
  $region1: #{autoencoder_forward.1} parent=0
    #allocation2 [shape = 'u8[524288]{0}', space=vmem, size = 0x80000, scoped, tag = 'input window, operand 1, single buffered']
    #allocation3 [shape = 's32[1]{0}', space=sflag, size = 0x4, scoped, tag = 'scoped memory for autoencoder_forward.1']
    %8 = vsyncpa [#allocation3], 0
    // Predicated region
    $region2: #{autoencoder_forward.1} parent=1 // pred_check
      _
    $region3: #{autoencoder_forward.1} parent=1 // pred_check_branch
      %10 = sbr.rel (0) target = $region5
    $region4: #{autoencoder_forward.1} parent=1 // pred_region
      _
    $region5: #{autoencoder_forward.1} parent=1 // pred_fallthru
      _
    // Predicated region
    $region6: #{autoencoder_forward.1} parent=1 // pred_check
      _
    $region7: #{autoencoder_forward.1} parent=1 // pred_check_branch
      %12 = sbr.rel (0) target = $region9
    $region8: #{autoencoder_forward.1} parent=1 // pred_region
      %s14 = ssub.s32 16384, 16384
      %15 = vsyncadd [#allocation3], %s14
      %s16 = sshll.u32 [#allocation2], 4
      %s17 = int_to_ptr.vmem [resolvable:$true] %s16
      %22 = dma.hbm_to_vmem [thread:$0]  %s1, 16384, %s17, [#allocation3], 128, 128, 8
    $region9: #{autoencoder_forward.1} parent=1 // pred_fallthru
      _
    // Predicated region
    $region10: #{autoencoder_forward.1} parent=1 // pred_check
      _
    $region11: #{autoencoder_forward.1} parent=1 // pred_check_branch
      %24 = sbr.rel (0) target = $region13
    $region12: #{autoencoder_forward.1} parent=1 // pred_region
      _
    $region13: #{autoencoder_forward.1} parent=1 // pred_fallthru
      _
    // Predicated region
    $region14: #{autoencoder_forward.1} parent=1 // pred_check
      _
    $region15: #{autoencoder_forward.1} parent=1 // pred_check_branch
      %26 = sbr.rel (0) target = $region17
    $region16: #{autoencoder_forward.1} parent=1 // pred_region
      %27 = dma.done [#allocation3], 16384
    $region17: #{autoencoder_forward.1} parent=1 // pred_fallthru
      _
    %v28 = vld [vmem:[%s0] sm:$0x3]
    %v30 = vlaneseq
    %v31 = vshrl.u32 %v30, 7
    %v32 = vsub.s32 0, %v31
    %v33 = vrot.slane %v28, %v32
    %v34 = vlaneseq
    %v35 = vshrl.u32 %v34, 7
    %v36 = vsub.s32 1, %v35
    %v37 = vrot.slane %v28, %v36
    %v40 = vpack.c.bf16 %v33, %v33
    %v41 = vpack.c.bf16 %v37, %v37
    %v42 = vld [vmem:[#allocation2] sm:$0xff]
    %v43 = vld [vmem:[#allocation2 + $0x8] sm:$0xff]
    %v44 = vld [vmem:[#allocation2 + $0x10] sm:$0xff]
    %v45 = vld [vmem:[#allocation2 + $0x18] sm:$0xff]
    %v46 = vld [vmem:[#allocation2 + $0x20] sm:$0xff]
    %v47 = vld [vmem:[#allocation2 + $0x28] sm:$0xff]
    %v48 = vld [vmem:[#allocation2 + $0x30] sm:$0xff]
    %v49 = vld [vmem:[#allocation2 + $0x38] sm:$0xff]
    %v50 = vld [vmem:[#allocation2 + $0x40] sm:$0xff]
    %v51 = vld [vmem:[#allocation2 + $0x48] sm:$0xff]
    %v52 = vld [vmem:[#allocation2 + $0x50] sm:$0xff]
    %v53 = vld [vmem:[#allocation2 + $0x58] sm:$0xff]
    %v54 = vld [vmem:[#allocation2 + $0x60] sm:$0xff]
    %v55 = vld [vmem:[#allocation2 + $0x68] sm:$0xff]
    %v56 = vld [vmem:[#allocation2 + $0x70] sm:$0xff]
    %v57 = vld [vmem:[#allocation2 + $0x78] sm:$0xff]
    %v58 = vld [vmem:[#allocation2 + $0x80] sm:$0xff]
    %v59 = vld [vmem:[#allocation2 + $0x88] sm:$0xff]
    %v60 = vld [vmem:[#allocation2 + $0x90] sm:$0xff]
    %v61 = vld [vmem:[#allocation2 + $0x98] sm:$0xff]
    %v62 = vld [vmem:[#allocation2 + $0xa0] sm:$0xff]
    %v63 = vld [vmem:[#allocation2 + $0xa8] sm:$0xff]
    %v64 = vld [vmem:[#allocation2 + $0xb0] sm:$0xff]
    %v65 = vld [vmem:[#allocation2 + $0xb8] sm:$0xff]
    %v66 = vld [vmem:[#allocation2 + $0xc0] sm:$0xff]
    %v67 = vld [vmem:[#allocation2 + $0xc8] sm:$0xff]
    %v68 = vld [vmem:[#allocation2 + $0xd0] sm:$0xff]
    %v69 = vld [vmem:[#allocation2 + $0xd8] sm:$0xff]
    %v70 = vld [vmem:[#allocation2 + $0xe0] sm:$0xff]
    %v71 = vld [vmem:[#allocation2 + $0xe8] sm:$0xff]
    %v72 = vld [vmem:[#allocation2 + $0xf0] sm:$0xff]
    %v73 = vld [vmem:[#allocation2 + $0xf8] sm:$0xff]
    %v74 = vld [vmem:[%s2] sm:$0x3]
    %v107 = vunpack.c.l.b16 %v42
    %v108 = vunpack.c.h.b16 %v42
    %v109 = vunpack.c.l.b16 %v43
    %v110 = vunpack.c.h.b16 %v43
    %v111 = vunpack.c.l.b16 %v44
    %v112 = vunpack.c.h.b16 %v44
    %v113 = vunpack.c.l.b16 %v45
    %v114 = vunpack.c.h.b16 %v45
    %v115 = vunpack.c.l.b16 %v46
    %v116 = vunpack.c.h.b16 %v46
    %v117 = vunpack.c.l.b16 %v47
    %v118 = vunpack.c.h.b16 %v47
    %v119 = vunpack.c.l.b16 %v48
    %v120 = vunpack.c.h.b16 %v48
    %v121 = vunpack.c.l.b16 %v49
    %v122 = vunpack.c.h.b16 %v49
    %v123 = vunpack.c.l.b16 %v50
    %v124 = vunpack.c.h.b16 %v50
    %v125 = vunpack.c.l.b16 %v51
    %v126 = vunpack.c.h.b16 %v51
    %v127 = vunpack.c.l.b16 %v52
    %v128 = vunpack.c.h.b16 %v52
    %v129 = vunpack.c.l.b16 %v53
    %v130 = vunpack.c.h.b16 %v53
    %v131 = vunpack.c.l.b16 %v54
    %v132 = vunpack.c.h.b16 %v54
    %v133 = vunpack.c.l.b16 %v55
    %v134 = vunpack.c.h.b16 %v55
    %v135 = vunpack.c.l.b16 %v56
    %v136 = vunpack.c.h.b16 %v56
    %v137 = vunpack.c.l.b16 %v57
    %v138 = vunpack.c.h.b16 %v57
    %v139 = vunpack.c.l.b16 %v58
    %v140 = vunpack.c.h.b16 %v58
    %v141 = vunpack.c.l.b16 %v59
    %v142 = vunpack.c.h.b16 %v59
    %v143 = vunpack.c.l.b16 %v60
    %v144 = vunpack.c.h.b16 %v60
    %v145 = vunpack.c.l.b16 %v61
    %v146 = vunpack.c.h.b16 %v61
    %v147 = vunpack.c.l.b16 %v62
    %v148 = vunpack.c.h.b16 %v62
    %v149 = vunpack.c.l.b16 %v63
    %v150 = vunpack.c.h.b16 %v63
    %v151 = vunpack.c.l.b16 %v64
    %v152 = vunpack.c.h.b16 %v64
    %v153 = vunpack.c.l.b16 %v65
    %v154 = vunpack.c.h.b16 %v65
    %v155 = vunpack.c.l.b16 %v66
    %v156 = vunpack.c.h.b16 %v66
    %v157 = vunpack.c.l.b16 %v67
    %v158 = vunpack.c.h.b16 %v67
    %v159 = vunpack.c.l.b16 %v68
    %v160 = vunpack.c.h.b16 %v68
    %v161 = vunpack.c.l.b16 %v69
    %v162 = vunpack.c.h.b16 %v69
    %v163 = vunpack.c.l.b16 %v70
    %v164 = vunpack.c.h.b16 %v70
    %v165 = vunpack.c.l.b16 %v71
    %v166 = vunpack.c.h.b16 %v71
    %v167 = vunpack.c.l.b16 %v72
    %v168 = vunpack.c.h.b16 %v72
    %v169 = vunpack.c.l.b16 %v73
    %v170 = vunpack.c.h.b16 %v73
    %v171 = vpack.c.b16 %v109, %v107
    %v172 = vpack.c.b16 %v110, %v108
    %v173 = vpack.c.b16 %v113, %v111
    %v174 = vpack.c.b16 %v114, %v112
    %v175 = vpack.c.b16 %v117, %v115
    %v176 = vpack.c.b16 %v118, %v116
    %v177 = vpack.c.b16 %v121, %v119
    %v178 = vpack.c.b16 %v122, %v120
    %v179 = vpack.c.b16 %v125, %v123
    %v180 = vpack.c.b16 %v126, %v124
    %v181 = vpack.c.b16 %v129, %v127
    %v182 = vpack.c.b16 %v130, %v128
    %v183 = vpack.c.b16 %v133, %v131
    %v184 = vpack.c.b16 %v134, %v132
    %v185 = vpack.c.b16 %v137, %v135
    %v186 = vpack.c.b16 %v138, %v136
    %v187 = vpack.c.b16 %v141, %v139
    %v188 = vpack.c.b16 %v142, %v140
    %v189 = vpack.c.b16 %v145, %v143
    %v190 = vpack.c.b16 %v146, %v144
    %v191 = vpack.c.b16 %v149, %v147
    %v192 = vpack.c.b16 %v150, %v148
    %v193 = vpack.c.b16 %v153, %v151
    %v194 = vpack.c.b16 %v154, %v152
    %v195 = vpack.c.b16 %v157, %v155
    %v196 = vpack.c.b16 %v158, %v156
    %v197 = vpack.c.b16 %v161, %v159
    %v198 = vpack.c.b16 %v162, %v160
    %v199 = vpack.c.b16 %v165, %v163
    %v200 = vpack.c.b16 %v166, %v164
    %v201 = vpack.c.b16 %v169, %v167
    %v202 = vpack.c.b16 %v170, %v168
    %v236 = vlaneseq
    %v237 = vshrl.u32 %v236, 7
    %v238 = vsub.s32 0, %v237
    %v239 = vrot.slane %v74, %v238
    %v240 = vlaneseq
    %v241 = vshrl.u32 %v240, 7
    %v242 = vsub.s32 1, %v241
    %v243 = vrot.slane %v74, %v242
    %246 = vmatprep.subr.bf16.mxu0 %v172
    %247 = vmatpush1.bf16.msra.mxu0 %v171
    %248 = vmatprep.subr.bf16.mxu0 %v174
    %249 = vmatpush1.bf16.msra.mxu0 %v173
    %250 = vmatprep.subr.bf16.mxu0 %v176
    %251 = vmatpush1.bf16.msra.mxu0 %v175
    %252 = vmatprep.subr.bf16.mxu0 %v178
    %253 = vmatpush1.bf16.msra.mxu0 %v177
    %254 = vmatprep.subr.bf16.mxu0 %v180
    %255 = vmatpush1.bf16.msra.mxu0 %v179
    %256 = vmatprep.subr.bf16.mxu0 %v182
    %257 = vmatpush1.bf16.msra.mxu0 %v181
    %258 = vmatprep.subr.bf16.mxu0 %v184
    %259 = vmatpush1.bf16.msra.mxu0 %v183
    %260 = vmatprep.subr.bf16.mxu0 %v186
    %261 = vmatpush1.bf16.msra.mxu0 %v185
    %262 = vmatprep.subr.bf16.mxu0 %v188
    %263 = vmatpush1.bf16.msra.mxu0 %v187
    %264 = vmatprep.subr.bf16.mxu0 %v190
    %265 = vmatpush1.bf16.msra.mxu0 %v189
    %266 = vmatprep.subr.bf16.mxu0 %v192
    %267 = vmatpush1.bf16.msra.mxu0 %v191
    %268 = vmatprep.subr.bf16.mxu0 %v194
    %269 = vmatpush1.bf16.msra.mxu0 %v193
    %270 = vmatprep.subr.bf16.mxu0 %v196
    %271 = vmatpush1.bf16.msra.mxu0 %v195
    %272 = vmatprep.subr.bf16.mxu0 %v198
    %273 = vmatpush1.bf16.msra.mxu0 %v197
    %274 = vmatprep.subr.bf16.mxu0 %v200
    %275 = vmatpush1.bf16.msra.mxu0 %v199
    %276 = vmatprep.subr.bf16.mxu0 %v202
    %277 = vmatpush1.bf16.msra.mxu0 %v201
    %278 = vmatprep.mubr.bf16.mxu0 %v41
    %279 = vmatmul.mubr.bf16.gmra.mrb[0].mxu0 %v40
    %v280 = vpop.f32.mrb[0].mxu0
    %v281 = vadd.f32 %v239, %v280
    %v282 = vpop.f32.mrb[0].mxu0
    %v283 = vadd.f32 %v243, %v282
    %v284 = vpop.f32.mrb[0].mxu0
    %v285 = vpop.f32.mrb[0].mxu0
    %286 = vdwg.mxu0
    %v287 = vtanh.pop %v281
    %v288 = vtanh.pop %v283
    %v289 = vpack.c.bf16 %v287, %v287
    %v290 = vpack.c.bf16 %v288, %v288
    %s291 = scalar_lea.vmem [#allocation2], 256
    %v292 = vld [vmem:[%s291] sm:$0xff]
    %v293 = vld [vmem:[%s291 + $0x8] sm:$0xff]
    %v294 = vld [vmem:[%s291 + $0x10] sm:$0xff]
    %v295 = vld [vmem:[%s291 + $0x18] sm:$0xff]
    %v296 = vld [vmem:[%s291 + $0x20] sm:$0xff]
    %v297 = vld [vmem:[%s291 + $0x28] sm:$0xff]
    %v298 = vld [vmem:[%s291 + $0x30] sm:$0xff]
    %v299 = vld [vmem:[%s291 + $0x38] sm:$0xff]
    %v300 = vld [vmem:[%s291 + $0x40] sm:$0xff]
    %v301 = vld [vmem:[%s291 + $0x48] sm:$0xff]
    %v302 = vld [vmem:[%s291 + $0x50] sm:$0xff]
    %v303 = vld [vmem:[%s291 + $0x58] sm:$0xff]
    %v304 = vld [vmem:[%s291 + $0x60] sm:$0xff]
    %v305 = vld [vmem:[%s291 + $0x68] sm:$0xff]
    %v306 = vld [vmem:[%s291 + $0x70] sm:$0xff]
    %v307 = vld [vmem:[%s291 + $0x78] sm:$0xff]
    %v308 = vld [vmem:[%s291 + $0x80] sm:$0xff]
    %v309 = vld [vmem:[%s291 + $0x88] sm:$0xff]
    %v310 = vld [vmem:[%s291 + $0x90] sm:$0xff]
    %v311 = vld [vmem:[%s291 + $0x98] sm:$0xff]
    %v312 = vld [vmem:[%s291 + $0xa0] sm:$0xff]
    %v313 = vld [vmem:[%s291 + $0xa8] sm:$0xff]
    %v314 = vld [vmem:[%s291 + $0xb0] sm:$0xff]
    %v315 = vld [vmem:[%s291 + $0xb8] sm:$0xff]
    %v316 = vld [vmem:[%s291 + $0xc0] sm:$0xff]
    %v317 = vld [vmem:[%s291 + $0xc8] sm:$0xff]
    %v318 = vld [vmem:[%s291 + $0xd0] sm:$0xff]
    %v319 = vld [vmem:[%s291 + $0xd8] sm:$0xff]
    %v320 = vld [vmem:[%s291 + $0xe0] sm:$0xff]
    %v321 = vld [vmem:[%s291 + $0xe8] sm:$0xff]
    %v322 = vld [vmem:[%s291 + $0xf0] sm:$0xff]
    %v323 = vld [vmem:[%s291 + $0xf8] sm:$0xff]
    %s324 = scalar_lea.vmem %s2, 2
    %v325 = vld [vmem:[%s324] sm:$0x3]
    %v358 = vunpack.c.l.b16 %v292
    %v359 = vunpack.c.h.b16 %v292
    %v360 = vunpack.c.l.b16 %v293
    %v361 = vunpack.c.h.b16 %v293
    %v362 = vunpack.c.l.b16 %v294
    %v363 = vunpack.c.h.b16 %v294
    %v364 = vunpack.c.l.b16 %v295
    %v365 = vunpack.c.h.b16 %v295
    %v366 = vunpack.c.l.b16 %v296
    %v367 = vunpack.c.h.b16 %v296
    %v368 = vunpack.c.l.b16 %v297
    %v369 = vunpack.c.h.b16 %v297
    %v370 = vunpack.c.l.b16 %v298
    %v371 = vunpack.c.h.b16 %v298
    %v372 = vunpack.c.l.b16 %v299
    %v373 = vunpack.c.h.b16 %v299
    %v374 = vunpack.c.l.b16 %v300
    %v375 = vunpack.c.h.b16 %v300
    %v376 = vunpack.c.l.b16 %v301
    %v377 = vunpack.c.h.b16 %v301
    %v378 = vunpack.c.l.b16 %v302
    %v379 = vunpack.c.h.b16 %v302
    %v380 = vunpack.c.l.b16 %v303
    %v381 = vunpack.c.h.b16 %v303
    %v382 = vunpack.c.l.b16 %v304
    %v383 = vunpack.c.h.b16 %v304
    %v384 = vunpack.c.l.b16 %v305
    %v385 = vunpack.c.h.b16 %v305
    %v386 = vunpack.c.l.b16 %v306
    %v387 = vunpack.c.h.b16 %v306
    %v388 = vunpack.c.l.b16 %v307
    %v389 = vunpack.c.h.b16 %v307
    %v390 = vunpack.c.l.b16 %v308
    %v391 = vunpack.c.h.b16 %v308
    %v392 = vunpack.c.l.b16 %v309
    %v393 = vunpack.c.h.b16 %v309
    %v394 = vunpack.c.l.b16 %v310
    %v395 = vunpack.c.h.b16 %v310
    %v396 = vunpack.c.l.b16 %v311
    %v397 = vunpack.c.h.b16 %v311
    %v398 = vunpack.c.l.b16 %v312
    %v399 = vunpack.c.h.b16 %v312
    %v400 = vunpack.c.l.b16 %v313
    %v401 = vunpack.c.h.b16 %v313
    %v402 = vunpack.c.l.b16 %v314
    %v403 = vunpack.c.h.b16 %v314
    %v404 = vunpack.c.l.b16 %v315
    %v405 = vunpack.c.h.b16 %v315
    %v406 = vunpack.c.l.b16 %v316
    %v407 = vunpack.c.h.b16 %v316
    %v408 = vunpack.c.l.b16 %v317
    %v409 = vunpack.c.h.b16 %v317
    %v410 = vunpack.c.l.b16 %v318
    %v411 = vunpack.c.h.b16 %v318
    %v412 = vunpack.c.l.b16 %v319
    %v413 = vunpack.c.h.b16 %v319
    %v414 = vunpack.c.l.b16 %v320
    %v415 = vunpack.c.h.b16 %v320
    %v416 = vunpack.c.l.b16 %v321
    %v417 = vunpack.c.h.b16 %v321
    %v418 = vunpack.c.l.b16 %v322
    %v419 = vunpack.c.h.b16 %v322
    %v420 = vunpack.c.l.b16 %v323
    %v421 = vunpack.c.h.b16 %v323
    %v422 = vpack.c.b16 %v360, %v358
    %v423 = vpack.c.b16 %v361, %v359
    %v424 = vpack.c.b16 %v364, %v362
    %v425 = vpack.c.b16 %v365, %v363
    %v426 = vpack.c.b16 %v368, %v366
    %v427 = vpack.c.b16 %v369, %v367
    %v428 = vpack.c.b16 %v372, %v370
    %v429 = vpack.c.b16 %v373, %v371
    %v430 = vpack.c.b16 %v376, %v374
    %v431 = vpack.c.b16 %v377, %v375
    %v432 = vpack.c.b16 %v380, %v378
    %v433 = vpack.c.b16 %v381, %v379
    %v434 = vpack.c.b16 %v384, %v382
    %v435 = vpack.c.b16 %v385, %v383
    %v436 = vpack.c.b16 %v388, %v386
    %v437 = vpack.c.b16 %v389, %v387
    %v438 = vpack.c.b16 %v392, %v390
    %v439 = vpack.c.b16 %v393, %v391
    %v440 = vpack.c.b16 %v396, %v394
    %v441 = vpack.c.b16 %v397, %v395
    %v442 = vpack.c.b16 %v400, %v398
    %v443 = vpack.c.b16 %v401, %v399
    %v444 = vpack.c.b16 %v404, %v402
    %v445 = vpack.c.b16 %v405, %v403
    %v446 = vpack.c.b16 %v408, %v406
    %v447 = vpack.c.b16 %v409, %v407
    %v448 = vpack.c.b16 %v412, %v410
    %v449 = vpack.c.b16 %v413, %v411
    %v450 = vpack.c.b16 %v416, %v414
    %v451 = vpack.c.b16 %v417, %v415
    %v452 = vpack.c.b16 %v420, %v418
    %v453 = vpack.c.b16 %v421, %v419
    %v487 = vlaneseq
    %v488 = vshrl.u32 %v487, 7
    %v489 = vsub.s32 0, %v488
    %v490 = vrot.slane %v325, %v489
    %v491 = vlaneseq
    %v492 = vshrl.u32 %v491, 7
    %v493 = vsub.s32 1, %v492
    %v494 = vrot.slane %v325, %v493
    %497 = vmatprep.subr.bf16.mxu0 %v423
    %498 = vmatpush1.bf16.msra.mxu0 %v422
    %499 = vmatprep.subr.bf16.mxu0 %v425
    %500 = vmatpush1.bf16.msra.mxu0 %v424
    %501 = vmatprep.subr.bf16.mxu0 %v427
    %502 = vmatpush1.bf16.msra.mxu0 %v426
    %503 = vmatprep.subr.bf16.mxu0 %v429
    %504 = vmatpush1.bf16.msra.mxu0 %v428
    %505 = vmatprep.subr.bf16.mxu0 %v431
    %506 = vmatpush1.bf16.msra.mxu0 %v430
    %507 = vmatprep.subr.bf16.mxu0 %v433
    %508 = vmatpush1.bf16.msra.mxu0 %v432
    %509 = vmatprep.subr.bf16.mxu0 %v435
    %510 = vmatpush1.bf16.msra.mxu0 %v434
    %511 = vmatprep.subr.bf16.mxu0 %v437
    %512 = vmatpush1.bf16.msra.mxu0 %v436
    %513 = vmatprep.subr.bf16.mxu0 %v439
    %514 = vmatpush1.bf16.msra.mxu0 %v438
    %515 = vmatprep.subr.bf16.mxu0 %v441
    %516 = vmatpush1.bf16.msra.mxu0 %v440
    %517 = vmatprep.subr.bf16.mxu0 %v443
    %518 = vmatpush1.bf16.msra.mxu0 %v442
    %519 = vmatprep.subr.bf16.mxu0 %v445
    %520 = vmatpush1.bf16.msra.mxu0 %v444
    %521 = vmatprep.subr.bf16.mxu0 %v447
    %522 = vmatpush1.bf16.msra.mxu0 %v446
    %523 = vmatprep.subr.bf16.mxu0 %v449
    %524 = vmatpush1.bf16.msra.mxu0 %v448
    %525 = vmatprep.subr.bf16.mxu0 %v451
    %526 = vmatpush1.bf16.msra.mxu0 %v450
    %527 = vmatprep.subr.bf16.mxu0 %v453
    %528 = vmatpush1.bf16.msra.mxu0 %v452
    %529 = vmatprep.mubr.bf16.mxu0 %v290
    %530 = vmatmul.mubr.bf16.gmra.mrb[0].mxu0 %v289
    %v531 = vpop.f32.mrb[0].mxu0
    %v532 = vadd.f32 %v490, %v531
    %v533 = vpop.f32.mrb[0].mxu0
    %v534 = vadd.f32 %v494, %v533
    %v535 = vpop.f32.mrb[0].mxu0
    %v536 = vpop.f32.mrb[0].mxu0
    %537 = vdwg.mxu0
    %v538 = vtanh.pop %v532
    %v539 = vtanh.pop %v534
    %v540 = vpack.c.bf16 %v538, %v538
    %v541 = vpack.c.bf16 %v539, %v539
    %s542 = scalar_lea.vmem [#allocation2], 512
    %v543 = vld [vmem:[%s542] sm:$0xff]
    %v544 = vld [vmem:[%s542 + $0x8] sm:$0xff]
    %v545 = vld [vmem:[%s542 + $0x10] sm:$0xff]
    %v546 = vld [vmem:[%s542 + $0x18] sm:$0xff]
    %v547 = vld [vmem:[%s542 + $0x20] sm:$0xff]
    %v548 = vld [vmem:[%s542 + $0x28] sm:$0xff]
    %v549 = vld [vmem:[%s542 + $0x30] sm:$0xff]
    %v550 = vld [vmem:[%s542 + $0x38] sm:$0xff]
    %v551 = vld [vmem:[%s542 + $0x40] sm:$0xff]
    %v552 = vld [vmem:[%s542 + $0x48] sm:$0xff]
    %v553 = vld [vmem:[%s542 + $0x50] sm:$0xff]
    %v554 = vld [vmem:[%s542 + $0x58] sm:$0xff]
    %v555 = vld [vmem:[%s542 + $0x60] sm:$0xff]
    %v556 = vld [vmem:[%s542 + $0x68] sm:$0xff]
    %v557 = vld [vmem:[%s542 + $0x70] sm:$0xff]
    %v558 = vld [vmem:[%s542 + $0x78] sm:$0xff]
    %v559 = vld [vmem:[%s542 + $0x80] sm:$0xff]
    %v560 = vld [vmem:[%s542 + $0x88] sm:$0xff]
    %v561 = vld [vmem:[%s542 + $0x90] sm:$0xff]
    %v562 = vld [vmem:[%s542 + $0x98] sm:$0xff]
    %v563 = vld [vmem:[%s542 + $0xa0] sm:$0xff]
    %v564 = vld [vmem:[%s542 + $0xa8] sm:$0xff]
    %v565 = vld [vmem:[%s542 + $0xb0] sm:$0xff]
    %v566 = vld [vmem:[%s542 + $0xb8] sm:$0xff]
    %v567 = vld [vmem:[%s542 + $0xc0] sm:$0xff]
    %v568 = vld [vmem:[%s542 + $0xc8] sm:$0xff]
    %v569 = vld [vmem:[%s542 + $0xd0] sm:$0xff]
    %v570 = vld [vmem:[%s542 + $0xd8] sm:$0xff]
    %v571 = vld [vmem:[%s542 + $0xe0] sm:$0xff]
    %v572 = vld [vmem:[%s542 + $0xe8] sm:$0xff]
    %v573 = vld [vmem:[%s542 + $0xf0] sm:$0xff]
    %v574 = vld [vmem:[%s542 + $0xf8] sm:$0xff]
    %s575 = scalar_lea.vmem %s2, 4
    %v576 = vld [vmem:[%s575] sm:$0x3]
    %v609 = vunpack.c.l.b16 %v543
    %v610 = vunpack.c.h.b16 %v543
    %v611 = vunpack.c.l.b16 %v544
    %v612 = vunpack.c.h.b16 %v544
    %v613 = vunpack.c.l.b16 %v545
    %v614 = vunpack.c.h.b16 %v545
    %v615 = vunpack.c.l.b16 %v546
    %v616 = vunpack.c.h.b16 %v546
    %v617 = vunpack.c.l.b16 %v547
    %v618 = vunpack.c.h.b16 %v547
    %v619 = vunpack.c.l.b16 %v548
    %v620 = vunpack.c.h.b16 %v548
    %v621 = vunpack.c.l.b16 %v549
    %v622 = vunpack.c.h.b16 %v549
    %v623 = vunpack.c.l.b16 %v550
    %v624 = vunpack.c.h.b16 %v550
    %v625 = vunpack.c.l.b16 %v551
    %v626 = vunpack.c.h.b16 %v551
    %v627 = vunpack.c.l.b16 %v552
    %v628 = vunpack.c.h.b16 %v552
    %v629 = vunpack.c.l.b16 %v553
    %v630 = vunpack.c.h.b16 %v553
    %v631 = vunpack.c.l.b16 %v554
    %v632 = vunpack.c.h.b16 %v554
    %v633 = vunpack.c.l.b16 %v555
    %v634 = vunpack.c.h.b16 %v555
    %v635 = vunpack.c.l.b16 %v556
    %v636 = vunpack.c.h.b16 %v556
    %v637 = vunpack.c.l.b16 %v557
    %v638 = vunpack.c.h.b16 %v557
    %v639 = vunpack.c.l.b16 %v558
    %v640 = vunpack.c.h.b16 %v558
    %v641 = vunpack.c.l.b16 %v559
    %v642 = vunpack.c.h.b16 %v559
    %v643 = vunpack.c.l.b16 %v560
    %v644 = vunpack.c.h.b16 %v560
    %v645 = vunpack.c.l.b16 %v561
    %v646 = vunpack.c.h.b16 %v561
    %v647 = vunpack.c.l.b16 %v562
    %v648 = vunpack.c.h.b16 %v562
    %v649 = vunpack.c.l.b16 %v563
    %v650 = vunpack.c.h.b16 %v563
    %v651 = vunpack.c.l.b16 %v564
    %v652 = vunpack.c.h.b16 %v564
    %v653 = vunpack.c.l.b16 %v565
    %v654 = vunpack.c.h.b16 %v565
    %v655 = vunpack.c.l.b16 %v566
    %v656 = vunpack.c.h.b16 %v566
    %v657 = vunpack.c.l.b16 %v567
    %v658 = vunpack.c.h.b16 %v567
    %v659 = vunpack.c.l.b16 %v568
    %v660 = vunpack.c.h.b16 %v568
    %v661 = vunpack.c.l.b16 %v569
    %v662 = vunpack.c.h.b16 %v569
    %v663 = vunpack.c.l.b16 %v570
    %v664 = vunpack.c.h.b16 %v570
    %v665 = vunpack.c.l.b16 %v571
    %v666 = vunpack.c.h.b16 %v571
    %v667 = vunpack.c.l.b16 %v572
    %v668 = vunpack.c.h.b16 %v572
    %v669 = vunpack.c.l.b16 %v573
    %v670 = vunpack.c.h.b16 %v573
    %v671 = vunpack.c.l.b16 %v574
    %v672 = vunpack.c.h.b16 %v574
    %v673 = vpack.c.b16 %v611, %v609
    %v674 = vpack.c.b16 %v612, %v610
    %v675 = vpack.c.b16 %v615, %v613
    %v676 = vpack.c.b16 %v616, %v614
    %v677 = vpack.c.b16 %v619, %v617
    %v678 = vpack.c.b16 %v620, %v618
    %v679 = vpack.c.b16 %v623, %v621
    %v680 = vpack.c.b16 %v624, %v622
    %v681 = vpack.c.b16 %v627, %v625
    %v682 = vpack.c.b16 %v628, %v626
    %v683 = vpack.c.b16 %v631, %v629
    %v684 = vpack.c.b16 %v632, %v630
    %v685 = vpack.c.b16 %v635, %v633
    %v686 = vpack.c.b16 %v636, %v634
    %v687 = vpack.c.b16 %v639, %v637
    %v688 = vpack.c.b16 %v640, %v638
    %v689 = vpack.c.b16 %v643, %v641
    %v690 = vpack.c.b16 %v644, %v642
    %v691 = vpack.c.b16 %v647, %v645
    %v692 = vpack.c.b16 %v648, %v646
    %v693 = vpack.c.b16 %v651, %v649
    %v694 = vpack.c.b16 %v652, %v650
    %v695 = vpack.c.b16 %v655, %v653
    %v696 = vpack.c.b16 %v656, %v654
    %v697 = vpack.c.b16 %v659, %v657
    %v698 = vpack.c.b16 %v660, %v658
    %v699 = vpack.c.b16 %v663, %v661
    %v700 = vpack.c.b16 %v664, %v662
    %v701 = vpack.c.b16 %v667, %v665
    %v702 = vpack.c.b16 %v668, %v666
    %v703 = vpack.c.b16 %v671, %v669
    %v704 = vpack.c.b16 %v672, %v670
    %v738 = vlaneseq
    %v739 = vshrl.u32 %v738, 7
    %v740 = vsub.s32 0, %v739
    %v741 = vrot.slane %v576, %v740
    %v742 = vlaneseq
    %v743 = vshrl.u32 %v742, 7
    %v744 = vsub.s32 1, %v743
    %v745 = vrot.slane %v576, %v744
    %748 = vmatprep.subr.bf16.mxu0 %v674
    %749 = vmatpush1.bf16.msra.mxu0 %v673
    %750 = vmatprep.subr.bf16.mxu0 %v676
    %751 = vmatpush1.bf16.msra.mxu0 %v675
    %752 = vmatprep.subr.bf16.mxu0 %v678
    %753 = vmatpush1.bf16.msra.mxu0 %v677
    %754 = vmatprep.subr.bf16.mxu0 %v680
    %755 = vmatpush1.bf16.msra.mxu0 %v679
    %756 = vmatprep.subr.bf16.mxu0 %v682
    %757 = vmatpush1.bf16.msra.mxu0 %v681
    %758 = vmatprep.subr.bf16.mxu0 %v684
    %759 = vmatpush1.bf16.msra.mxu0 %v683
    %760 = vmatprep.subr.bf16.mxu0 %v686
    %761 = vmatpush1.bf16.msra.mxu0 %v685
    %762 = vmatprep.subr.bf16.mxu0 %v688
    %763 = vmatpush1.bf16.msra.mxu0 %v687
    %764 = vmatprep.subr.bf16.mxu0 %v690
    %765 = vmatpush1.bf16.msra.mxu0 %v689
    %766 = vmatprep.subr.bf16.mxu0 %v692
    %767 = vmatpush1.bf16.msra.mxu0 %v691
    %768 = vmatprep.subr.bf16.mxu0 %v694
    %769 = vmatpush1.bf16.msra.mxu0 %v693
    %770 = vmatprep.subr.bf16.mxu0 %v696
    %771 = vmatpush1.bf16.msra.mxu0 %v695
    %772 = vmatprep.subr.bf16.mxu0 %v698
    %773 = vmatpush1.bf16.msra.mxu0 %v697
    %774 = vmatprep.subr.bf16.mxu0 %v700
    %775 = vmatpush1.bf16.msra.mxu0 %v699
    %776 = vmatprep.subr.bf16.mxu0 %v702
    %777 = vmatpush1.bf16.msra.mxu0 %v701
    %778 = vmatprep.subr.bf16.mxu0 %v704
    %779 = vmatpush1.bf16.msra.mxu0 %v703
    %780 = vmatprep.mubr.bf16.mxu0 %v541
    %781 = vmatmul.mubr.bf16.gmra.mrb[0].mxu0 %v540
    %v782 = vpop.f32.mrb[0].mxu0
    %v783 = vadd.f32 %v741, %v782
    %v784 = vpop.f32.mrb[0].mxu0
    %v785 = vadd.f32 %v745, %v784
    %v786 = vpop.f32.mrb[0].mxu0
    %v787 = vpop.f32.mrb[0].mxu0
    %788 = vdwg.mxu0
    %v789 = vtanh.pop %v783
    %v790 = vtanh.pop %v785
    %v791 = vpack.c.bf16 %v789, %v789
    %v792 = vpack.c.bf16 %v790, %v790
    %s793 = scalar_lea.vmem [#allocation2], 768
    %v794 = vld [vmem:[%s793] sm:$0xff]
    %v795 = vld [vmem:[%s793 + $0x8] sm:$0xff]
    %v796 = vld [vmem:[%s793 + $0x10] sm:$0xff]
    %v797 = vld [vmem:[%s793 + $0x18] sm:$0xff]
    %v798 = vld [vmem:[%s793 + $0x20] sm:$0xff]
    %v799 = vld [vmem:[%s793 + $0x28] sm:$0xff]
    %v800 = vld [vmem:[%s793 + $0x30] sm:$0xff]
    %v801 = vld [vmem:[%s793 + $0x38] sm:$0xff]
    %v802 = vld [vmem:[%s793 + $0x40] sm:$0xff]
    %v803 = vld [vmem:[%s793 + $0x48] sm:$0xff]
    %v804 = vld [vmem:[%s793 + $0x50] sm:$0xff]
    %v805 = vld [vmem:[%s793 + $0x58] sm:$0xff]
    %v806 = vld [vmem:[%s793 + $0x60] sm:$0xff]
    %v807 = vld [vmem:[%s793 + $0x68] sm:$0xff]
    %v808 = vld [vmem:[%s793 + $0x70] sm:$0xff]
    %v809 = vld [vmem:[%s793 + $0x78] sm:$0xff]
    %v810 = vld [vmem:[%s793 + $0x80] sm:$0xff]
    %v811 = vld [vmem:[%s793 + $0x88] sm:$0xff]
    %v812 = vld [vmem:[%s793 + $0x90] sm:$0xff]
    %v813 = vld [vmem:[%s793 + $0x98] sm:$0xff]
    %v814 = vld [vmem:[%s793 + $0xa0] sm:$0xff]
    %v815 = vld [vmem:[%s793 + $0xa8] sm:$0xff]
    %v816 = vld [vmem:[%s793 + $0xb0] sm:$0xff]
    %v817 = vld [vmem:[%s793 + $0xb8] sm:$0xff]
    %v818 = vld [vmem:[%s793 + $0xc0] sm:$0xff]
    %v819 = vld [vmem:[%s793 + $0xc8] sm:$0xff]
    %v820 = vld [vmem:[%s793 + $0xd0] sm:$0xff]
    %v821 = vld [vmem:[%s793 + $0xd8] sm:$0xff]
    %v822 = vld [vmem:[%s793 + $0xe0] sm:$0xff]
    %v823 = vld [vmem:[%s793 + $0xe8] sm:$0xff]
    %v824 = vld [vmem:[%s793 + $0xf0] sm:$0xff]
    %v825 = vld [vmem:[%s793 + $0xf8] sm:$0xff]
    %s826 = scalar_lea.vmem %s2, 6
    %v827 = vld [vmem:[%s826] sm:$0x3]
    %v860 = vunpack.c.l.b16 %v794
    %v861 = vunpack.c.h.b16 %v794
    %v862 = vunpack.c.l.b16 %v795
    %v863 = vunpack.c.h.b16 %v795
    %v864 = vunpack.c.l.b16 %v796
    %v865 = vunpack.c.h.b16 %v796
    %v866 = vunpack.c.l.b16 %v797
    %v867 = vunpack.c.h.b16 %v797
    %v868 = vunpack.c.l.b16 %v798
    %v869 = vunpack.c.h.b16 %v798
    %v870 = vunpack.c.l.b16 %v799
    %v871 = vunpack.c.h.b16 %v799
    %v872 = vunpack.c.l.b16 %v800
    %v873 = vunpack.c.h.b16 %v800
    %v874 = vunpack.c.l.b16 %v801
    %v875 = vunpack.c.h.b16 %v801
    %v876 = vunpack.c.l.b16 %v802
    %v877 = vunpack.c.h.b16 %v802
    %v878 = vunpack.c.l.b16 %v803
    %v879 = vunpack.c.h.b16 %v803
    %v880 = vunpack.c.l.b16 %v804
    %v881 = vunpack.c.h.b16 %v804
    %v882 = vunpack.c.l.b16 %v805
    %v883 = vunpack.c.h.b16 %v805
    %v884 = vunpack.c.l.b16 %v806
    %v885 = vunpack.c.h.b16 %v806
    %v886 = vunpack.c.l.b16 %v807
    %v887 = vunpack.c.h.b16 %v807
    %v888 = vunpack.c.l.b16 %v808
    %v889 = vunpack.c.h.b16 %v808
    %v890 = vunpack.c.l.b16 %v809
    %v891 = vunpack.c.h.b16 %v809
    %v892 = vunpack.c.l.b16 %v810
    %v893 = vunpack.c.h.b16 %v810
    %v894 = vunpack.c.l.b16 %v811
    %v895 = vunpack.c.h.b16 %v811
    %v896 = vunpack.c.l.b16 %v812
    %v897 = vunpack.c.h.b16 %v812
    %v898 = vunpack.c.l.b16 %v813
    %v899 = vunpack.c.h.b16 %v813
    %v900 = vunpack.c.l.b16 %v814
    %v901 = vunpack.c.h.b16 %v814
    %v902 = vunpack.c.l.b16 %v815
    %v903 = vunpack.c.h.b16 %v815
    %v904 = vunpack.c.l.b16 %v816
    %v905 = vunpack.c.h.b16 %v816
    %v906 = vunpack.c.l.b16 %v817
    %v907 = vunpack.c.h.b16 %v817
    %v908 = vunpack.c.l.b16 %v818
    %v909 = vunpack.c.h.b16 %v818
    %v910 = vunpack.c.l.b16 %v819
    %v911 = vunpack.c.h.b16 %v819
    %v912 = vunpack.c.l.b16 %v820
    %v913 = vunpack.c.h.b16 %v820
    %v914 = vunpack.c.l.b16 %v821
    %v915 = vunpack.c.h.b16 %v821
    %v916 = vunpack.c.l.b16 %v822
    %v917 = vunpack.c.h.b16 %v822
    %v918 = vunpack.c.l.b16 %v823
    %v919 = vunpack.c.h.b16 %v823
    %v920 = vunpack.c.l.b16 %v824
    %v921 = vunpack.c.h.b16 %v824
    %v922 = vunpack.c.l.b16 %v825
    %v923 = vunpack.c.h.b16 %v825
    %v924 = vpack.c.b16 %v862, %v860
    %v925 = vpack.c.b16 %v863, %v861
    %v926 = vpack.c.b16 %v866, %v864
    %v927 = vpack.c.b16 %v867, %v865
    %v928 = vpack.c.b16 %v870, %v868
    %v929 = vpack.c.b16 %v871, %v869
    %v930 = vpack.c.b16 %v874, %v872
    %v931 = vpack.c.b16 %v875, %v873
    %v932 = vpack.c.b16 %v878, %v876
    %v933 = vpack.c.b16 %v879, %v877
    %v934 = vpack.c.b16 %v882, %v880
    %v935 = vpack.c.b16 %v883, %v881
    %v936 = vpack.c.b16 %v886, %v884
    %v937 = vpack.c.b16 %v887, %v885
    %v938 = vpack.c.b16 %v890, %v888
    %v939 = vpack.c.b16 %v891, %v889
    %v940 = vpack.c.b16 %v894, %v892
    %v941 = vpack.c.b16 %v895, %v893
    %v942 = vpack.c.b16 %v898, %v896
    %v943 = vpack.c.b16 %v899, %v897
    %v944 = vpack.c.b16 %v902, %v900
    %v945 = vpack.c.b16 %v903, %v901
    %v946 = vpack.c.b16 %v906, %v904
    %v947 = vpack.c.b16 %v907, %v905
    %v948 = vpack.c.b16 %v910, %v908
    %v949 = vpack.c.b16 %v911, %v909
    %v950 = vpack.c.b16 %v914, %v912
    %v951 = vpack.c.b16 %v915, %v913
    %v952 = vpack.c.b16 %v918, %v916
    %v953 = vpack.c.b16 %v919, %v917
    %v954 = vpack.c.b16 %v922, %v920
    %v955 = vpack.c.b16 %v923, %v921
    %v989 = vlaneseq
    %v990 = vshrl.u32 %v989, 7
    %v991 = vsub.s32 0, %v990
    %v992 = vrot.slane %v827, %v991
    %v993 = vlaneseq
    %v994 = vshrl.u32 %v993, 7
    %v995 = vsub.s32 1, %v994
    %v996 = vrot.slane %v827, %v995
    %999 = vmatprep.subr.bf16.mxu0 %v925
    %1000 = vmatpush1.bf16.msra.mxu0 %v924
    %1001 = vmatprep.subr.bf16.mxu0 %v927
    %1002 = vmatpush1.bf16.msra.mxu0 %v926
    %1003 = vmatprep.subr.bf16.mxu0 %v929
    %1004 = vmatpush1.bf16.msra.mxu0 %v928
    %1005 = vmatprep.subr.bf16.mxu0 %v931
    %1006 = vmatpush1.bf16.msra.mxu0 %v930
    %1007 = vmatprep.subr.bf16.mxu0 %v933
    %1008 = vmatpush1.bf16.msra.mxu0 %v932
    %1009 = vmatprep.subr.bf16.mxu0 %v935
    %1010 = vmatpush1.bf16.msra.mxu0 %v934
    %1011 = vmatprep.subr.bf16.mxu0 %v937
    %1012 = vmatpush1.bf16.msra.mxu0 %v936
    %1013 = vmatprep.subr.bf16.mxu0 %v939
    %1014 = vmatpush1.bf16.msra.mxu0 %v938
    %1015 = vmatprep.subr.bf16.mxu0 %v941
    %1016 = vmatpush1.bf16.msra.mxu0 %v940
    %1017 = vmatprep.subr.bf16.mxu0 %v943
    %1018 = vmatpush1.bf16.msra.mxu0 %v942
    %1019 = vmatprep.subr.bf16.mxu0 %v945
    %1020 = vmatpush1.bf16.msra.mxu0 %v944
    %1021 = vmatprep.subr.bf16.mxu0 %v947
    %1022 = vmatpush1.bf16.msra.mxu0 %v946
    %1023 = vmatprep.subr.bf16.mxu0 %v949
    %1024 = vmatpush1.bf16.msra.mxu0 %v948
    %1025 = vmatprep.subr.bf16.mxu0 %v951
    %1026 = vmatpush1.bf16.msra.mxu0 %v950
    %1027 = vmatprep.subr.bf16.mxu0 %v953
    %1028 = vmatpush1.bf16.msra.mxu0 %v952
    %1029 = vmatprep.subr.bf16.mxu0 %v955
    %1030 = vmatpush1.bf16.msra.mxu0 %v954
    %1031 = vmatprep.mubr.bf16.mxu0 %v792
    %1032 = vmatmul.mubr.bf16.gmra.mrb[0].mxu0 %v791
    %v1033 = vpop.f32.mrb[0].mxu0
    %v1034 = vadd.f32 %v992, %v1033
    %v1035 = vpop.f32.mrb[0].mxu0
    %v1036 = vadd.f32 %v996, %v1035
    %v1037 = vpop.f32.mrb[0].mxu0
    %v1038 = vpop.f32.mrb[0].mxu0
    %1039 = vdwg.mxu0
    %v1040 = vxor.u32 %v1034, 2147483648
    %v1041 = vxor.u32 %v1036, 2147483648
    %v1042 = vmul.f32 %v1040, 1.442695
    %v1043 = vpow.pop %v1042
    %v1044 = vmul.f32 %v1041, 1.442695
    %v1045 = vpow.pop %v1044
    %v1046 = vadd.f32 %v1043, 1.0
    %v1047 = vadd.f32 %v1045, 1.0
    %v1048 = vrcp.pop %v1046
    %v1049 = vmul.f32 1.0, %v1048
    %v1050 = vrcp.pop %v1047
    %v1051 = vmul.f32 1.0, %v1050
    %v1054 = vcombine.low %v1049, %v1051
    %v1056 = vunpack.c.l.s4 1966171168
    %v1057 = vunpack.c.0.s8 %v1056
    %v1058 = vlaneseq
    %v1059 = vshrl.u32 %v1058, 7
    %v1060 = vsub.s32 %v1057, %v1059
    %v1061 = vrot.slane %v1054, %v1060
    %v1063 = vunpack.c.l.s4 1966171168
    %v1064 = vunpack.c.0.s8 %v1063
    %v1065 = vlaneseq
    %v1066 = vshrl.u32 %v1065, 7
    %v1067 = vsub.s32 %v1064, %v1066
    %v1068 = vrot.slane %v1061, %v1067
    %v1070 = vlaneseq
    %vm1071 = vcmp.ge.s32.totalorder %v1070, 0
    %vm1072 = vcmp.lt.s32.totalorder %v1070, 256
    %vm1073 = vmand %vm1071, %vm1072
    %1074 = vst.msk [vmem:[%s3] sm:$0x3] %vm1073, %v1068
    // Predicated region
    $region18: #{autoencoder_forward.1} parent=1 // pred_check
      _
    $region19: #{autoencoder_forward.1} parent=1 // pred_check_branch
      %1076 = sbr.rel (0) target = $region21
    $region20: #{autoencoder_forward.1} parent=1 // pred_region
      _
    $region21: #{autoencoder_forward.1} parent=1 // pred_fallthru
      _
    // Predicated region
    $region22: #{autoencoder_forward.1} parent=1 // pred_check
      _
    $region23: #{autoencoder_forward.1} parent=1 // pred_check_branch
      %1078 = sbr.rel (0) target = $region25
    $region24: #{autoencoder_forward.1} parent=1 // pred_region
      _
    $region25: #{autoencoder_forward.1} parent=1 // pred_fallthru
      _
    %1079 = vsyncpa [#allocation3], 1

</llo_original>
